<compile_context>
chip_gen: v6e
topology: v6e:2x2x1
jax: 0.10.0
libtpu: 0.0.40
codegen_flags: <defaults>
</compile_context>

<pallas_src>
import functools

import jax
import jax.numpy as jnp
from jax.experimental import pallas as pl
from jax.experimental.pallas import tpu as pltpu

_LANE = 128


def _layernorm_kernel(x_ref, scale_ref, shift_ref, o_ref, *,
                      eps, inv_true_dim, bf16_epilogue):
    # NOTE(correctness): rows are fully independent.  The tail grid step may
    # read unspecified rows (its block extends past n_rows); their stats can
    # be garbage but their stores are masked away by Pallas.  Do not add any
    # cross-row math to this kernel.
    x32 = x_ref[...].astype(jnp.float32)                     # (tile_rows, dim_p)
    # One-pass stats: sum and sum-of-squares reduce trees interleave, one
    # traversal of the tile.  Padded lanes are zero so they drop out; divide
    # by the true feature dim, not the padded one.
    s = jnp.sum(x32, axis=-1, keepdims=True)
    ss = jnp.sum(x32 * x32, axis=-1, keepdims=True)
    mean = s * inv_true_dim
    var = jnp.maximum(ss * inv_true_dim - mean * mean, 0.0)  # unbiased=False
    inv = jax.lax.rsqrt(var + eps)
    a = inv                                                  # (tile_rows, 1)
    b = -mean * inv                                          # (tile_rows, 1)
    if bf16_epilogue:
        # v6e/v7x packed-bf16 VALU: per-element normalize in bf16, stats f32.
        xc = x_ref[...]
        cd = xc.dtype
        y = xc * a.astype(cd) + b.astype(cd)                 # == (x - mean) * inv
        o_ref[...] = (y * scale_ref[...].astype(cd)
                      + shift_ref[...].astype(cd)).astype(o_ref.dtype)
    else:
        y = x32 * a + b
        o_ref[...] = (y * scale_ref[...].astype(jnp.float32)
                      + shift_ref[...].astype(jnp.float32)).astype(o_ref.dtype)


def _row_multiple(dtype):
    # Sublane packing: 8 rows for 4-byte dtypes, 16 for bf16, 32 for int8/fp8.
    itemsize = jnp.dtype(dtype).itemsize
    return max(8, 32 // itemsize)


def _vmem_capacity_bytes():
    try:
        return int(pltpu.get_tpu_info().vmem_capacity_bytes)
    except Exception:
        return 64 << 20  # conservative fallback (v7x per-core VMEM)


def _pick_tile_rows(n_rows, dim_p, in_dtype, out_dtype, vmem_tile_budget_bytes):
    rm = max(_row_multiple(in_dtype), _row_multiple(out_dtype))
    in_b = jnp.dtype(in_dtype).itemsize
    out_b = jnp.dtype(out_dtype).itemsize
    # Double-buffered input tile + double-buffered output tile held by the
    # pipeline, plus ~2 single-buffered f32 compute temporaries per row
    # (the x upcast and one elementwise temp) so the budget reflects what the
    # compiler actually keeps resident.
    bytes_per_row = 2 * dim_p * (in_b + out_b) + 2 * dim_p * 4
    tile = max(rm, vmem_tile_budget_bytes // bytes_per_row)
    tile = min(tile, 1024)
    # Keep >=8 grid steps when the input allows it, so each of v7x's two
    # TensorCores still runs >=4 pipeline steps after megacore sharding.
    tile = min(tile, max(rm, -(-n_rows // 8)))
    tile = max(rm, (tile // rm) * rm)
    tile = min(tile, -(-n_rows // rm) * rm)
    return tile
    # TODO(synk): add a dim-chunked partial-sum path for feature dims so large
    # that even an 8-row double-buffered block exceeds the VMEM budget
    # (roughly dim >~ 200K f32 on v7x's 64 MiB VMEM).


def layer_norm(x, scale, shift, eps=1e-5, tile_rows=None):
    """LayerNorm over the last axis of x, using a Pallas TPU kernel."""
    orig_shape = x.shape
    dim = orig_shape[-1]
    x2d = x.reshape(-1, dim)
    n_rows = x2d.shape[0]

    scale2d = scale.reshape(1, dim)
    shift2d = shift.reshape(1, dim)

    # Lane-dense padding: if dim isn't a multiple of 128, pad with zeros so
    # every output store is an unmasked full-lane vst.  Zeros don't perturb
    # sum/sumsq; the kernel divides by the true dim.  Pad is sliced off below.
    dim_p = -(-dim // _LANE) * _LANE
    if dim_p != dim:
        pad = ((0, 0), (0, dim_p - dim))
        x2d = jnp.pad(x2d, pad)
        scale2d = jnp.pad(scale2d, pad)
        shift2d = jnp.pad(shift2d, pad)

    vmem_cap = _vmem_capacity_bytes()
    vmem_limit = (3 * vmem_cap) // 4          # 48 MiB on v7x, 96 MiB on v5e/v6e
    tile_budget = vmem_cap // 2               # 32 MiB on v7x, 64 MiB on v5e/v6e
    if tile_rows is None:
        tile_rows = _pick_tile_rows(n_rows, dim_p, x2d.dtype, x2d.dtype,
                                    tile_budget)

    bf16_epilogue = jnp.dtype(x2d.dtype) == jnp.dtype(jnp.bfloat16)

    in_b = jnp.dtype(x2d.dtype).itemsize
    cost = pl.CostEstimate(
        flops=7 * n_rows * dim_p,
        transcendentals=n_rows,
        # scale/shift reads intentionally omitted (negligible vs x in/out).
        bytes_accessed=2 * n_rows * dim_p * in_b,
    )

    out = pl.pallas_call(
        functools.partial(_layernorm_kernel, eps=eps,
                          inv_true_dim=1.0 / dim,
                          bf16_epilogue=bf16_epilogue),
        out_shape=jax.ShapeDtypeStruct((n_rows, dim_p), x.dtype),
        grid_spec=pltpu.PrefetchScalarGridSpec(
            num_scalar_prefetch=0,
            grid=(pl.cdiv(n_rows, tile_rows),),   # tail block masked by Pallas
            in_specs=[
                pl.BlockSpec((tile_rows, dim_p), lambda i: (i, 0)),
                pl.BlockSpec((1, dim_p), lambda i: (0, 0)),
                pl.BlockSpec((1, dim_p), lambda i: (0, 0)),
            ],
            out_specs=pl.BlockSpec((tile_rows, dim_p), lambda i: (i, 0)),
        ),
        compiler_params=pltpu.CompilerParams(
            dimension_semantics=("parallel",),
            vmem_limit_bytes=vmem_limit,
        ),
        cost_estimate=cost,
    )(x2d, scale2d, shift2d)

    if dim_p != dim:
        out = out[:, :dim]
    return out.reshape(orig_shape)


if __name__ == "__main__":
    key = jax.random.PRNGKey(0)
    batch, seq, hidden = 2, 8, 32
    x = jax.random.normal(key, (batch, seq, hidden), dtype=jnp.float32)

    # Deterministic parameters matching nn.Parameter(torch.ones/zeros(dim)).
    scale = jnp.ones((hidden,), dtype=jnp.float32)
    shift = jnp.zeros((hidden,), dtype=jnp.float32)

    y = layer_norm(x, scale, shift)
    jax.block_until_ready(y)

    # Reference check in plain JAX (same semantics as the PyTorch module).
    mean = jnp.mean(x, axis=-1, keepdims=True)
    var = jnp.mean((x - mean) ** 2, axis=-1, keepdims=True)
    ref = scale * ((x - mean) / jnp.sqrt(var + 1e-5)) + shift
    assert jnp.allclose(y, ref, atol=1e-5, rtol=1e-5), "mismatch vs reference"

    print("KERNEL_OK")
</pallas_src>

<mosaic_0001>
module attributes {stable_mosaic.version = 11 : i64} {
  func.func @_layernorm_kernel(%arg0: i32, %arg1: memref<8x128xf32, #tpu.memory_space<vmem>>, %arg2: memref<1x128xf32, #tpu.memory_space<vmem>>, %arg3: memref<1x128xf32, #tpu.memory_space<vmem>>, %arg4: memref<8x128xf32, #tpu.memory_space<vmem>>) attributes {dimension_semantics = [#tpu.dimension_semantics<parallel>], iteration_bounds = array<i64: 2>, scalar_prefetch = 0 : i64, scratch_operands = 0 : i64, tpu.core_type = #tpu.core_type<tc>, window_params = [{transform_indices = @transform_0, window_bounds = array<i64: 8, 128>}, {pipeline_mode = #tpu.pipeline_mode<synchronous>, transform_indices = @transform_1, window_bounds = array<i64: 1, 128>}, {pipeline_mode = #tpu.pipeline_mode<synchronous>, transform_indices = @transform_2, window_bounds = array<i64: 1, 128>}, {transform_indices = @transform_3, window_bounds = array<i64: 8, 128>}]} {
    %c0 = arith.constant 0 : index
    %c0_0 = arith.constant 0 : index
    %0 = vector.load %arg1[%c0, %c0_0] : memref<8x128xf32, #tpu.memory_space<vmem>>, vector<8x128xf32>
    %cst = arith.constant dense<0.000000e+00> : vector<8xf32>
    %1 = vector.multi_reduction <add>, %0, %cst [1] : vector<8x128xf32> to vector<8xf32>
    %2 = vector.shape_cast %1 : vector<8xf32> to vector<8x1xf32>
    %3 = arith.mulf %0, %0 : vector<8x128xf32>
    %cst_1 = arith.constant dense<0.000000e+00> : vector<8xf32>
    %4 = vector.multi_reduction <add>, %3, %cst_1 [1] : vector<8x128xf32> to vector<8xf32>
    %5 = vector.shape_cast %4 : vector<8xf32> to vector<8x1xf32>
    %cst_2 = arith.constant 3.125000e-02 : f32
    %6 = vector.broadcast %cst_2 : f32 to vector<8x1xf32>
    %7 = arith.mulf %2, %6 : vector<8x1xf32>
    %cst_3 = arith.constant 3.125000e-02 : f32
    %8 = vector.broadcast %cst_3 : f32 to vector<8x1xf32>
    %9 = arith.mulf %5, %8 : vector<8x1xf32>
    %10 = arith.mulf %7, %7 : vector<8x1xf32>
    %11 = arith.subf %9, %10 : vector<8x1xf32>
    %cst_4 = arith.constant 0.000000e+00 : f32
    %12 = vector.broadcast %cst_4 : f32 to vector<8x1xf32>
    %13 = arith.maximumf %11, %12 : vector<8x1xf32>
    %cst_5 = arith.constant 9.99999974E-6 : f32
    %14 = vector.broadcast %cst_5 : f32 to vector<8x1xf32>
    %15 = arith.addf %13, %14 : vector<8x1xf32>
    %16 = math.rsqrt %15 : vector<8x1xf32>
    %cst_6 = arith.constant 0.000000e+00 : f32
    %17 = vector.broadcast %cst_6 : f32 to vector<8x1xf32>
    %18 = arith.subf %17, %7 : vector<8x1xf32>
    %19 = arith.mulf %18, %16 : vector<8x1xf32>
    %20 = vector.broadcast %16 : vector<8x1xf32> to vector<8x128xf32>
    %21 = arith.mulf %0, %20 : vector<8x128xf32>
    %22 = vector.broadcast %19 : vector<8x1xf32> to vector<8x128xf32>
    %23 = arith.addf %21, %22 : vector<8x128xf32>
    %c0_7 = arith.constant 0 : index
    %c0_8 = arith.constant 0 : index
    %24 = vector.load %arg2[%c0_7, %c0_8] : memref<1x128xf32, #tpu.memory_space<vmem>>, vector<1x128xf32>
    %25 = vector.broadcast %24 : vector<1x128xf32> to vector<8x128xf32>
    %26 = arith.mulf %23, %25 : vector<8x128xf32>
    %c0_9 = arith.constant 0 : index
    %c0_10 = arith.constant 0 : index
    %27 = vector.load %arg3[%c0_9, %c0_10] : memref<1x128xf32, #tpu.memory_space<vmem>>, vector<1x128xf32>
    %28 = vector.broadcast %27 : vector<1x128xf32> to vector<8x128xf32>
    %29 = arith.addf %26, %28 : vector<8x128xf32>
    %c0_11 = arith.constant 0 : index
    %c0_12 = arith.constant 0 : index
    %30 = vector.load %arg4[%c0_11, %c0_12] : memref<8x128xf32, #tpu.memory_space<vmem>>, vector<8x128xf32>
    tpu.vector_store %arg4[%c0_11, %c0_12], %29 {strides = array<i32>} : memref<8x128xf32, #tpu.memory_space<vmem>>, vector<8x128xf32>,
    return
  }
  func.func @transform_0(%arg0: i32) -> (i32, i32) {
    %c0_i32 = arith.constant 0 : i32
    %c0_i32_0 = arith.constant 0 : i32
    return %arg0, %c0_i32 : i32, i32
  }
  func.func @transform_1(%arg0: i32) -> (i32, i32) {
    %c0_i32 = arith.constant 0 : i32
    %c0_i32_0 = arith.constant 0 : i32
    %c0_i32_1 = arith.constant 0 : i32
    return %c0_i32, %c0_i32_0 : i32, i32
  }
  func.func @transform_2(%arg0: i32) -> (i32, i32) {
    %c0_i32 = arith.constant 0 : i32
    %c0_i32_0 = arith.constant 0 : i32
    %c0_i32_1 = arith.constant 0 : i32
    return %c0_i32, %c0_i32_0 : i32, i32
  }
  func.func @transform_3(%arg0: i32) -> (i32, i32) {
    %c0_i32 = arith.constant 0 : i32
    %c0_i32_0 = arith.constant 0 : i32
    return %arg0, %c0_i32 : i32, i32
  }
}

</mosaic_0001>

<llo_original>
// kernel: tpu_custom_call.1
$region0: #{tpu_custom_call.1}
  #allocation0 [shape = 'u32[]', space=smem, size = 0x4, offset = 0x4, fixed_abs, tag = 'smem constant byte address 0x4 - core index']
  #allocation1 [shape = 'u32[144,128]{1,0:T(1,128)}', space=vmem, size = 0x12000, scoped, tag = 'internal scratch']
  %s0 = inlined_call_operand.hbm [shape: f32[16,128], index: 0, kind: input, shape index: {}]
  %s1 = inlined_call_operand.vmem [shape: f32[1,128], index: 1, kind: input, shape index: {}]
  %s2 = inlined_call_operand.vmem [shape: f32[1,128], index: 2, kind: input, shape index: {}]
  %s3 = inlined_call_operand.hbm [shape: f32[16,128], index: 3, kind: output, shape index: {}]
  %s4 = sld [smem:[#allocation0]]
  $region49: #{tpu_custom_call.1} parent=0
    _
  %s6 = ssub.s32 1, %s4
  %s7 = scalar_select 0, %s6, %s4
  $region1: #{tpu_custom_call.1} parent=0
    #allocation2 [shape = 'u8[8192]{0}', space=vmem, size = 0x2000, scoped, tag = 'input window, operand 0']
    #allocation3 [shape = 's32[2]{0}', space=sflag, size = 0x8, scoped, tag = 'scoped memory for tpu_custom_call.1']
    #allocation4 [shape = 's32[2]{0}', space=sflag, size = 0x8, scoped, tag = 'scoped memory for tpu_custom_call.1']
    #allocation5 [shape = 'u8[8192]{0}', space=vmem, size = 0x2000, scoped, tag = 'output window, operand 0']
    %8 = vsyncpa [#allocation3], 0
    %s9 = scalar_lea.sflag [#allocation3], 1
    %10 = vsyncpa %s9, 0
    %11 = vsyncpa [#allocation4], 0
    %s12 = scalar_lea.sflag [#allocation4], 1
    %13 = vsyncpa %s12, 0
    loop: start=0, step=1, limit=4
    $region2: #{tpu_custom_call.1} parent=1 // loop_pre_header
      _
    $region3: #{tpu_custom_call.1} parent=1 // loop_header
      %s15 = sphi 0, %s19
      %p16 = scmp.ge.s32.totalorder %s15, 4
      %s25 = sphi 0, %s27
      %s28 = sphi 0, %s25
      %s29 = sphi 0, %s28
      %s45 = sphi 0, %s29
      %s49 = sphi 0, %s49
      %s51 = sphi 0, %s49
      %s52 = sphi 0, %s51
      %s66 = sphi 0, %s52
      %s70 = sphi 0, %s70
      %s72 = sphi 0, %s70
      %s73 = sphi 0, %s72
      %s87 = sphi 0, %s73
      %s93 = sphi 0, %s95
      %s96 = sphi 0, %s93
      %s97 = sphi 0, %s96
      %s113 = sphi 0, %s97
    $region4: #{tpu_custom_call.1} parent=1 // loop_header_branch
      %18 = sbr.rel (%p16) target = $region8
    $region5: #{tpu_custom_call.1} parent=1 // loop_body
      %s20 = ssub.s32 %s15, 1
      %s21 = ssub.s32 %s15, 2
      %s22 = sadd.s32 %s15, 1
      %s23 = ssub.s32 %s15, %s22
      %p24 = scmp.eq.s32.totalorder %s23, 0
      %s26 = sadd.s32 %s25, 1
      %s27 = scalar_select %p24, %s25, %s26
      %p30 = pneg %p24
      %p31 = scmp.eq.s32.totalorder %s15, 1
      %p32 = por %p30, %p31
      %p33 = scmp.ne.s32.totalorder %s25, %s28
      %p34 = scmp.eq.s32.totalorder %s15, 0
      %p35 = por %p33, %p34
      %p36 = scmp.ne.s32.totalorder %s25, %s28
      %p37 = scmp.eq.s32.totalorder %s20, 1
      %p38 = por %p36, %p37
      %p39 = scmp.ne.s32.totalorder %s28, %s29
      %p40 = scmp.eq.s32.totalorder %s20, 0
      %p41 = por %p39, %p40
      %p42 = scmp.ne.s32.totalorder %s28, %s29
      %p43 = scmp.eq.s32.totalorder %s21, 1
      %p44 = por %p42, %p43
      %p46 = scmp.ne.s32.totalorder %s29, %s45
      %p47 = scmp.eq.s32.totalorder %s21, 0
      %p48 = por %p46, %p47
      %s50 = sadd.s32 %s49, 1
      %p53 = scmp.eq.s32.totalorder %s15, 1
      %p54 = scmp.ne.s32.totalorder %s49, %s51
      %p55 = scmp.eq.s32.totalorder %s15, 0
      %p56 = por %p54, %p55
      %p57 = scmp.ne.s32.totalorder %s49, %s51
      %p58 = scmp.eq.s32.totalorder %s20, 1
      %p59 = por %p57, %p58
      %p60 = scmp.ne.s32.totalorder %s51, %s52
      %p61 = scmp.eq.s32.totalorder %s20, 0
      %p62 = por %p60, %p61
      %p63 = scmp.ne.s32.totalorder %s51, %s52
      %p64 = scmp.eq.s32.totalorder %s21, 1
      %p65 = por %p63, %p64
      %p67 = scmp.ne.s32.totalorder %s52, %s66
      %p68 = scmp.eq.s32.totalorder %s21, 0
      %p69 = por %p67, %p68
      %s71 = sadd.s32 %s70, 1
      %p74 = scmp.eq.s32.totalorder %s15, 1
      %p75 = scmp.ne.s32.totalorder %s70, %s72
      %p76 = scmp.eq.s32.totalorder %s15, 0
      %p77 = por %p75, %p76
      %p78 = scmp.ne.s32.totalorder %s70, %s72
      %p79 = scmp.eq.s32.totalorder %s20, 1
      %p80 = por %p78, %p79
      %p81 = scmp.ne.s32.totalorder %s72, %s73
      %p82 = scmp.eq.s32.totalorder %s20, 0
      %p83 = por %p81, %p82
      %p84 = scmp.ne.s32.totalorder %s72, %s73
      %p85 = scmp.eq.s32.totalorder %s21, 1
      %p86 = por %p84, %p85
      %p88 = scmp.ne.s32.totalorder %s73, %s87
      %p89 = scmp.eq.s32.totalorder %s21, 0
      %p90 = por %p88, %p89
      %s91 = ssub.s32 %s15, %s22
      %p92 = scmp.eq.s32.totalorder %s91, 0
      %s94 = sadd.s32 %s93, 1
      %s95 = scalar_select %p92, %s93, %s94
      %p98 = pneg %p92
      %p99 = scmp.eq.s32.totalorder %s15, 1
      %p100 = por %p98, %p99
      %p101 = scmp.ne.s32.totalorder %s93, %s96
      %p102 = scmp.eq.s32.totalorder %s15, 0
      %p103 = por %p101, %p102
      %p104 = scmp.ne.s32.totalorder %s93, %s96
      %p105 = scmp.eq.s32.totalorder %s20, 1
      %p106 = por %p104, %p105
      %p107 = scmp.ne.s32.totalorder %s96, %s97
      %p108 = scmp.eq.s32.totalorder %s20, 0
      %p109 = por %p107, %p108
      %p110 = scmp.ne.s32.totalorder %s96, %s97
      %p111 = scmp.eq.s32.totalorder %s21, 1
      %p112 = por %p110, %p111
      %p114 = scmp.ne.s32.totalorder %s97, %s113
      %p115 = scmp.eq.s32.totalorder %s21, 0
      %p116 = por %p114, %p115
      %p117 = scmp.le.s32.totalorder 1, %s15
      %p118 = scmp.lt.s32.totalorder %s15, 3
      %p119 = pnand %p117, %p118
      %p120 = pneg %p119
      // Predicated region
      $region9: #{tpu_custom_call.1} parent=5 // pred_check
        _
      $region10: #{tpu_custom_call.1} parent=5 // pred_check_branch
        %122 = sbr.rel (%p119) target = $region12
      $region11: #{tpu_custom_call.1} parent=5 // pred_region
        %s123 = ssub.s32 %s15, 1
        // Predicated region
        $region13: #{tpu_custom_call.1} parent=11 // pred_check
          %p124 = pneg %p62
        $region14: #{tpu_custom_call.1} parent=11 // pred_check_branch
          %126 = sbr.rel (%p124) target = $region16
        $region15: #{tpu_custom_call.1} parent=11 // pred_region
          _
        $region16: #{tpu_custom_call.1} parent=11 // pred_fallthru
          _
        // Predicated region
        $region17: #{tpu_custom_call.1} parent=11 // pred_check
          %p127 = pneg %p83
        $region18: #{tpu_custom_call.1} parent=11 // pred_check_branch
          %129 = sbr.rel (%p127) target = $region20
        $region19: #{tpu_custom_call.1} parent=11 // pred_region
          _
        $region20: #{tpu_custom_call.1} parent=11 // pred_fallthru
          _
      $region12: #{tpu_custom_call.1} parent=5 // pred_fallthru
        _
      %p130 = scmp.lt.s32.totalorder %s15, 2
      // Predicated region
      $region21: #{tpu_custom_call.1} parent=5 // pred_check
        %p131 = pneg %p130
      $region22: #{tpu_custom_call.1} parent=5 // pred_check_branch
        %133 = sbr.rel (%p131) target = $region24
      $region23: #{tpu_custom_call.1} parent=5 // pred_region
        // Predicated region
        $region25: #{tpu_custom_call.1} parent=23 // pred_check
          %p134 = pneg %p35
        $region26: #{tpu_custom_call.1} parent=23 // pred_check_branch
          %136 = sbr.rel (%p134) target = $region28
        $region27: #{tpu_custom_call.1} parent=23 // pred_region
          %s137 = sand.u32 %s25, 1
          %s138 = scalar_lea.sflag [#allocation3], %s137
          %s139 = sand.u32 %s25, 1
          %s140 = smul.addr %s139, 8
          %s141 = scalar_lea.vmem [#allocation2], %s140
          %s143 = ssub.s32 128, 128
          %144 = vsyncadd %s138, %s143
          %s145 = smul.addr %s15, 128
          %s146 = scalar_lea.hbm %s0, %s145
          %s148 = sshll.u32 %s141, 4
          %s149 = int_to_ptr.vmem [resolvable:$true] %s148
          %151 = dma.hbm_to_vmem [thread:$0]  %s146, 128, %s149, %s138
        $region28: #{tpu_custom_call.1} parent=23 // pred_fallthru
          _
      $region24: #{tpu_custom_call.1} parent=5 // pred_fallthru
        _
      %p152 = scmp.le.s32.totalorder 1, %s15
      %p153 = scmp.lt.s32.totalorder %s15, 3
      %p154 = pnand %p152, %p153
      %p155 = pneg %p154
      // Predicated region
      $region29: #{tpu_custom_call.1} parent=5 // pred_check
        _
      $region30: #{tpu_custom_call.1} parent=5 // pred_check_branch
        %157 = sbr.rel (%p154) target = $region32
      $region31: #{tpu_custom_call.1} parent=5 // pred_region
        %s158 = ssub.s32 %s15, 1
        %s159 = sand.u32 %s28, 1
        %s160 = scalar_lea.sflag [#allocation3], %s159
        %s161 = sand.u32 %s28, 1
        %s162 = smul.addr %s161, 8
        %s163 = scalar_lea.vmem [#allocation2], %s162
        // Predicated region
        $region33: #{tpu_custom_call.1} parent=31 // pred_check
          %p164 = pneg %p41
        $region34: #{tpu_custom_call.1} parent=31 // pred_check_branch
          %166 = sbr.rel (%p164) target = $region36
        $region35: #{tpu_custom_call.1} parent=31 // pred_region
          %167 = dma.done %s160, 128
        $region36: #{tpu_custom_call.1} parent=31 // pred_fallthru
          _
        %s168 = sand.u32 %s28, 1
        %s169 = scalar_lea.sflag [#allocation3], %s168
        %s170 = sand.u32 %s28, 1
        %s171 = smul.addr %s170, 8
        %s172 = scalar_lea.vmem [#allocation2], %s171
        %p173 = pneg %p41
        %p174 = pneg %p38
        %p175 = pneg %p62
        %p176 = pneg %p59
        %p177 = pneg %p83
        %p178 = pneg %p80
        %p179 = pneg %p109
        %p180 = pneg %p106
        %s181 = sand.u32 %s96, 1
        %s182 = scalar_lea.sflag [#allocation4], %s181
        %s183 = sand.u32 %s96, 1
        %s184 = smul.addr %s183, 8
        %s185 = scalar_lea.vmem [#allocation5], %s184
        %v186 = vld [vmem:[%s163] sm:$0xff]
        %187 = vadd.xlane.f32.xlu0 %v186
        %v188 = vpop.xlane.xlu0 %187
        %v189 = vmul.f32 %v186, %v186
        %190 = vadd.xlane.f32.xlu0 %v189
        %v191 = vpop.xlane.xlu0 %190
        %v192 = vmul.f32 %v188, 0.03125
        %v193 = vmul.f32 %v191, 0.03125
        %v194 = vmul.f32 %v192, %v192
        %v195 = vsub.f32 %v193, %v194
        %v196 = vmax.f32 %v195, 0.0
        %v197 = vadd.f32 %v196, 1e-05
        %v198 = vrsqrt.pop %v197
        %v199 = vsub.f32 0.0, %v192
        %v200 = vmul.f32 %v199, %v198
        %v201 = vmul.f32 %v186, %v198
        %v202 = vadd.f32 %v201, %v200
        %v203 = vld [vmem:[%s1] sm:$0x1]
        %v205 = vlaneseq
        %v206 = vshrl.u32 %v205, 7
        %v207 = vsub.s32 0, %v206
        %v208 = vrot.slane %v203, %v207
        %v210 = vmul.f32 %v202, %v208
        %v211 = vld [vmem:[%s2] sm:$0x1]
        %v213 = vlaneseq
        %v214 = vshrl.u32 %v213, 7
        %v215 = vsub.s32 0, %v214
        %v216 = vrot.slane %v211, %v215
        %v218 = vadd.f32 %v210, %v216
        %219 = vst [vmem:[%s185] sm:$0xff] %v218
        %s220 = sand.u32 %s96, 1
        %s221 = scalar_lea.sflag [#allocation4], %s220
        %s222 = sand.u32 %s96, 1
        %s223 = smul.addr %s222, 8
        %s224 = scalar_lea.vmem [#allocation5], %s223
        // Predicated region
        $region37: #{tpu_custom_call.1} parent=31 // pred_check
          %p225 = pneg %p106
        $region38: #{tpu_custom_call.1} parent=31 // pred_check_branch
          %227 = sbr.rel (%p225) target = $region40
        $region39: #{tpu_custom_call.1} parent=31 // pred_region
          %s229 = ssub.s32 128, 128
          %230 = vsyncadd %s221, %s229
          %s231 = smul.addr %s20, 128
          %s232 = scalar_lea.hbm %s3, %s231
          %s234 = sshll.u32 %s224, 4
          %s235 = int_to_ptr.vmem [resolvable:$true] %s234
          %237 = dma.vmem_to_hbm [thread:$0]  %s235, 128, %s232, %s221
        $region40: #{tpu_custom_call.1} parent=31 // pred_fallthru
          _
      $region32: #{tpu_custom_call.1} parent=5 // pred_fallthru
        _
      %p238 = scmp.le.s32.totalorder 2, %s15
      // Predicated region
      $region41: #{tpu_custom_call.1} parent=5 // pred_check
        %p239 = pneg %p238
      $region42: #{tpu_custom_call.1} parent=5 // pred_check_branch
        %241 = sbr.rel (%p239) target = $region44
      $region43: #{tpu_custom_call.1} parent=5 // pred_region
        %s242 = ssub.s32 %s15, 2
        // Predicated region
        $region45: #{tpu_custom_call.1} parent=43 // pred_check
          %p243 = pneg %p112
        $region46: #{tpu_custom_call.1} parent=43 // pred_check_branch
          %245 = sbr.rel (%p243) target = $region48
        $region47: #{tpu_custom_call.1} parent=43 // pred_region
          %s246 = sand.u32 %s97, 1
          %s247 = scalar_lea.sflag [#allocation4], %s246
          %s248 = sand.u32 %s97, 1
          %s249 = smul.addr %s248, 8
          %s250 = scalar_lea.vmem [#allocation5], %s249
          %251 = dma.done %s247, 128
        $region48: #{tpu_custom_call.1} parent=43 // pred_fallthru
          _
      $region44: #{tpu_custom_call.1} parent=5 // pred_fallthru
        _
    $region6: #{tpu_custom_call.1} parent=1 // loop_footer
      %s19 = sadd.s32 1, %s15
    $region7: #{tpu_custom_call.1} parent=1 // loop_footer_branch
      %14 = sbr.rel target = $region3
    $region8: #{tpu_custom_call.1} parent=1 // loop_exit
      _
    %252 = vsyncpa [#allocation3], 1
    %s253 = scalar_lea.sflag [#allocation3], 1
    %254 = vsyncpa %s253, 1
    %255 = vsyncpa [#allocation4], 1
    %s256 = scalar_lea.sflag [#allocation4], 1
    %257 = vsyncpa %s256, 1

</llo_original>
